<compile_context>
chip_gen: v7x
topology: tpu7x:2x2x1
jax: 0.10.0
libtpu: 0.0.40
codegen_flags: <defaults>
</compile_context>

<pallas_src>
import functools

import jax
import jax.numpy as jnp
from jax import lax
from jax.experimental import pallas as pl
from jax.experimental.pallas import tpu as pltpu

LANES = 128
# 2048 x 128 x f32 = 1 MiB per input block; 2 inputs x 2 pipeline buffers + the
# 1 MiB accumulator ~= 5 MiB VMEM -> fits the default scoped VMEM limit on
# v5e (16 MiB) as well as v6e/v7x (32 MiB).
MAX_ROW_BLOCK = 2048


def _round_up(x, m):
    return ((x + m - 1) // m) * m


def _mrae_sum_kernel(out_ref, lab_ref, o_ref, acc_ref, *, n_rows, row_block,
                     needs_mask):
    """Accumulates sum(|out - lab| / lab) over an (n_rows, 128) slab."""
    step = pl.program_id(0)

    @pl.when(step == 0)
    def _():
        acc_ref[...] = jnp.zeros_like(acc_ref)

    out = out_ref[...].astype(jnp.float32)
    lab = lab_ref[...].astype(jnp.float32)

    if needs_mask:
        # The last block sticks out past n_rows; substitute (1, 1) there so its
        # error is exactly 0 and the divide never touches garbage/NaN padding.
        row = step * row_block + lax.broadcasted_iota(
            jnp.int32, (row_block, LANES), 0)
        valid = row < n_rows
        out = jnp.where(valid, out, jnp.float32(1.0))
        lab = jnp.where(valid, lab, jnp.float32(1.0))

    # Elementwise VPU/EUP work + a vreg-shaped VPU accumulate per step.
    acc_ref[...] += jnp.abs(out - lab) / lab

    @pl.when(step == pl.num_programs(0) - 1)
    def _():
        o_ref[0, 0] = jnp.sum(acc_ref[...])


def _mrae_main_sum(out2d, lab2d):
    """Pallas kernel call: returns sum(|out-lab|/lab) over a (n_rows, 128) slab."""
    n_rows = out2d.shape[0]
    row_block = min(MAX_ROW_BLOCK, _round_up(n_rows, 8))
    needs_mask = (n_rows % row_block) != 0
    grid = (pl.cdiv(n_rows, row_block),)

    kernel = functools.partial(
        _mrae_sum_kernel,
        n_rows=n_rows, row_block=row_block, needs_mask=needs_mask)

    # TODO(synk): on v7x, add a leading "parallel" grid axis (one partition per
    # TensorCore) with per-core partial-sum outputs for ~2x HBM pull.
    result = pl.pallas_call(
        kernel,
        out_shape=jax.ShapeDtypeStruct((1, 1), jnp.float32),
        grid_spec=pltpu.PrefetchScalarGridSpec(
            num_scalar_prefetch=0,
            grid=grid,
            in_specs=[
                pl.BlockSpec((row_block, LANES), lambda i: (i, 0)),
                pl.BlockSpec((row_block, LANES), lambda i: (i, 0)),
            ],
            out_specs=pl.BlockSpec(
                (1, 1), lambda i: (0, 0), memory_space=pltpu.SMEM),
            scratch_shapes=[pltpu.VMEM((row_block, LANES), jnp.float32)],
        ),
        compiler_params=pltpu.CompilerParams(
            dimension_semantics=("arbitrary",)),
    )(out2d, lab2d)
    return result[0, 0]


def mrae_loss(outputs, label):
    """Pallas TPU implementation of Loss_valid.forward: mean(|out-lab|/lab)."""
    assert outputs.shape == label.shape
    total_n = outputs.size  # true element count (denominator of the mean)

    out_flat = outputs.reshape(-1)  # pure bitcast, keep native dtype
    lab_flat = label.reshape(-1)

    main_n = (total_n // LANES) * LANES  # full 128-lane rows go to the kernel
    total = jnp.float32(0.0)

    if main_n > 0:
        if main_n == total_n:
            out2d = out_flat.reshape(-1, LANES)  # pure bitcast, no copy
            lab2d = lab_flat.reshape(-1, LANES)
        else:
            out2d = out_flat[:main_n].reshape(-1, LANES)
            lab2d = lab_flat[:main_n].reshape(-1, LANES)
        total = total + _mrae_main_sum(out2d, lab2d)

    if main_n < total_n:
        # Tiny (< 128 element) ragged tail: plain-JAX sum, added to the total.
        o_t = out_flat[main_n:].astype(jnp.float32)
        l_t = lab_flat[main_n:].astype(jnp.float32)
        total = total + jnp.sum(jnp.abs(o_t - l_t) / l_t)

    return total / jnp.float32(total_n)


if __name__ == "__main__":
    key = jax.random.PRNGKey(0)
    k1, k2 = jax.random.split(key)
    # Small NCHW shapes consistent with an image-reconstruction loss.
    outputs = jax.random.uniform(
        k1, (2, 4, 16, 16), dtype=jnp.float32, minval=0.1, maxval=2.0)
    label = jax.random.uniform(
        k2, (2, 4, 16, 16), dtype=jnp.float32, minval=0.5, maxval=1.5)

    mrae = mrae_loss(outputs, label)
    jax.block_until_ready(mrae)

    # Reference check in plain JAX (same semantics as the PyTorch module).
    ref = jnp.mean(jnp.abs(outputs - label) / label)
    assert jnp.allclose(mrae, ref, rtol=1e-5, atol=1e-6), (mrae, ref)

    print("KERNEL_OK")
</pallas_src>

<mosaic_0001>
module attributes {stable_mosaic.version = 11 : i64} {
  func.func @_mrae_sum_kernel(%arg0: i32, %arg1: memref<16x128xf32, #tpu.memory_space<vmem>>, %arg2: memref<16x128xf32, #tpu.memory_space<vmem>>, %arg3: memref<1x1xf32, #tpu.memory_space<smem>>, %arg4: memref<16x128xf32, #tpu.memory_space<vmem>>) attributes {dimension_semantics = [#tpu.dimension_semantics<arbitrary>], iteration_bounds = array<i64: 1>, scalar_prefetch = 0 : i64, scratch_operands = 1 : i64, tpu.core_type = #tpu.core_type<tc>, window_params = [{transform_indices = @transform_0, window_bounds = array<i64: 16, 128>}, {transform_indices = @transform_1, window_bounds = array<i64: 16, 128>}, {transform_indices = @transform_2, window_bounds = array<i64: 1, 1>}]} {
    %c0_i32 = arith.constant 0 : i32
    %0 = arith.cmpi eq, %arg0, %c0_i32 : i32
    %1 = arith.extui %0 : i1 to i32
    %c0_i32_0 = arith.constant 0 : i32
    %2 = arith.cmpi ne, %1, %c0_i32_0 : i32
    scf.if %2 {
      %cst = arith.constant 0.000000e+00 : f32
      %14 = vector.broadcast %cst : f32 to vector<16x128xf32>
      %c0_10 = arith.constant 0 : index
      %c0_11 = arith.constant 0 : index
      %15 = vector.load %arg4[%c0_10, %c0_11] : memref<16x128xf32, #tpu.memory_space<vmem>>, vector<16x128xf32>
      tpu.vector_store %arg4[%c0_10, %c0_11], %14 {strides = array<i32>} : memref<16x128xf32, #tpu.memory_space<vmem>>, vector<16x128xf32>,
    } else {
    }
    %c0 = arith.constant 0 : index
    %c0_1 = arith.constant 0 : index
    %3 = vector.load %arg1[%c0, %c0_1] : memref<16x128xf32, #tpu.memory_space<vmem>>, vector<16x128xf32>
    %c0_2 = arith.constant 0 : index
    %c0_3 = arith.constant 0 : index
    %4 = vector.load %arg2[%c0_2, %c0_3] : memref<16x128xf32, #tpu.memory_space<vmem>>, vector<16x128xf32>
    %c0_4 = arith.constant 0 : index
    %c0_5 = arith.constant 0 : index
    %5 = vector.load %arg4[%c0_4, %c0_5] : memref<16x128xf32, #tpu.memory_space<vmem>>, vector<16x128xf32>
    %6 = arith.subf %3, %4 : vector<16x128xf32>
    %7 = math.absf %6 : vector<16x128xf32>
    %8 = arith.divf %7, %4 : vector<16x128xf32>
    %9 = arith.addf %5, %8 : vector<16x128xf32>
    %c0_6 = arith.constant 0 : index
    %c0_7 = arith.constant 0 : index
    %10 = vector.load %arg4[%c0_6, %c0_7] : memref<16x128xf32, #tpu.memory_space<vmem>>, vector<16x128xf32>
    tpu.vector_store %arg4[%c0_6, %c0_7], %9 {strides = array<i32>} : memref<16x128xf32, #tpu.memory_space<vmem>>, vector<16x128xf32>,
    %c0_i32_8 = arith.constant 0 : i32
    %11 = arith.cmpi eq, %arg0, %c0_i32_8 : i32
    %12 = arith.extui %11 : i1 to i32
    %c0_i32_9 = arith.constant 0 : i32
    %13 = arith.cmpi ne, %12, %c0_i32_9 : i32
    scf.if %13 {
      %c0_10 = arith.constant 0 : index
      %c0_11 = arith.constant 0 : index
      %14 = vector.load %arg4[%c0_10, %c0_11] : memref<16x128xf32, #tpu.memory_space<vmem>>, vector<16x128xf32>
      %15 = vector.shape_cast %14 : vector<16x128xf32> to vector<1x16x128xf32>
      %cst = arith.constant dense<0.000000e+00> : vector<1xf32>
      %16 = vector.multi_reduction <add>, %15, %cst [1, 2] : vector<1x16x128xf32> to vector<1xf32>
      %17 = vector.shape_cast %16 : vector<1xf32> to vector<1x1x1xf32>
      %18 = vector.extract %17[0, 0, 0] : f32 from vector<1x1x1xf32>
      %c0_12 = arith.constant 0 : index
      %c0_13 = arith.constant 0 : index
      %19 = memref.load %arg3[%c0_12, %c0_13] : memref<1x1xf32, #tpu.memory_space<smem>>
      memref.store %18, %arg3[%c0_12, %c0_13] : memref<1x1xf32, #tpu.memory_space<smem>>
    } else {
    }
    return
  }
  func.func @transform_0(%arg0: i32) -> (i32, i32) {
    %c0_i32 = arith.constant 0 : i32
    %c0_i32_0 = arith.constant 0 : i32
    return %arg0, %c0_i32 : i32, i32
  }
  func.func @transform_1(%arg0: i32) -> (i32, i32) {
    %c0_i32 = arith.constant 0 : i32
    %c0_i32_0 = arith.constant 0 : i32
    return %arg0, %c0_i32 : i32, i32
  }
  func.func @transform_2(%arg0: i32) -> (i32, i32) {
    %c0_i32 = arith.constant 0 : i32
    %c0_i32_0 = arith.constant 0 : i32
    %c0_i32_1 = arith.constant 0 : i32
    return %c0_i32, %c0_i32_0 : i32, i32
  }
}

</mosaic_0001>

<llo_original>
// kernel: tpu_custom_call.1
$region0: #{tpu_custom_call.1}
  #allocation0 [shape = 'u32[]', space=smem, size = 0x4, offset = 0x4, fixed_abs, tag = 'smem constant byte address 0x4 - core index']
  #allocation1 [shape = 'u32[144,128]{1,0:T(1,128)}', space=vmem, size = 0x12000, scoped, tag = 'internal scratch']
  #allocation2 [shape = 'f32[16,128]{1,0:T(8,128)}', space=vmem, size = 0x2000, scoped, tag = 'scratch operand']
  %s0 = inlined_call_operand.hbm [shape: f32[16,128], index: 0, kind: input, shape index: {}]
  %s1 = inlined_call_operand.hbm [shape: f32[16,128], index: 1, kind: input, shape index: {}]
  %s2 = inlined_call_operand.hbm [shape: f32[1,1], index: 2, kind: output, shape index: {}]
  %s3 = sld [smem:[#allocation0]]
  $region34: #{tpu_custom_call.1} parent=0
    _
  %s5 = ssub.s32 1, %s3
  %s6 = scalar_select 0, %s5, %s3
  $region1: #{tpu_custom_call.1} parent=0
    #allocation3 [shape = 'u8[8192]{0}', space=vmem, size = 0x2000, scoped, tag = 'input window, operand 0, single buffered']
    #allocation4 [shape = 's32[1]{0}', space=sflag, size = 0x4, scoped, tag = 'scoped memory for tpu_custom_call.1']
    #allocation5 [shape = 's32[1]{0}', space=sflag, size = 0x4, scoped, tag = 'scoped memory for tpu_custom_call.1']
    #allocation6 [shape = 'u8[8192]{0}', space=vmem, size = 0x2000, scoped, tag = 'input window, operand 1, single buffered']
    #allocation7 [shape = 's32[1]{0}', space=sflag, size = 0x4, scoped, tag = 'scoped memory for tpu_custom_call.1']
    #allocation8 [shape = 'u8[512]{0}', space=smem, size = 0x200, scoped, tag = 'output window, operand 0, single buffered']
    %7 = vsyncpa [#allocation4], 0
    %8 = vsyncpa [#allocation7], 0
    %9 = vsyncpa [#allocation5], 0
    // Predicated region
    $region2: #{tpu_custom_call.1} parent=1 // pred_check
      _
    $region3: #{tpu_custom_call.1} parent=1 // pred_check_branch
      %11 = sbr.rel (0) target = $region5
    $region4: #{tpu_custom_call.1} parent=1 // pred_region
      %s13 = ssub.s32 256, 256
      %14 = vsyncadd [#allocation4], %s13
      %s15 = sshll.u32 [#allocation3], 4
      %s16 = int_to_ptr.vmem [resolvable:$true] %s15
      %21 = dma.hbm_to_vmem [thread:$0]  %s0, 256, %s16, [#allocation4], 128, 128, 8
    $region5: #{tpu_custom_call.1} parent=1 // pred_fallthru
      _
    // Predicated region
    $region6: #{tpu_custom_call.1} parent=1 // pred_check
      _
    $region7: #{tpu_custom_call.1} parent=1 // pred_check_branch
      %23 = sbr.rel (0) target = $region9
    $region8: #{tpu_custom_call.1} parent=1 // pred_region
      %s25 = ssub.s32 256, 256
      %26 = vsyncadd [#allocation7], %s25
      %s27 = sshll.u32 [#allocation6], 4
      %s28 = int_to_ptr.vmem [resolvable:$true] %s27
      %33 = dma.hbm_to_vmem [thread:$0]  %s1, 256, %s28, [#allocation7], 128, 128, 8
    $region9: #{tpu_custom_call.1} parent=1 // pred_fallthru
      _
    // Predicated region
    $region10: #{tpu_custom_call.1} parent=1 // pred_check
      _
    $region11: #{tpu_custom_call.1} parent=1 // pred_check_branch
      %35 = sbr.rel (0) target = $region13
    $region12: #{tpu_custom_call.1} parent=1 // pred_region
      %36 = dma.done [#allocation4], 256
    $region13: #{tpu_custom_call.1} parent=1 // pred_fallthru
      _
    // Predicated region
    $region14: #{tpu_custom_call.1} parent=1 // pred_check
      _
    $region15: #{tpu_custom_call.1} parent=1 // pred_check_branch
      %38 = sbr.rel (0) target = $region17
    $region16: #{tpu_custom_call.1} parent=1 // pred_region
      %39 = dma.done [#allocation7], 256
    $region17: #{tpu_custom_call.1} parent=1 // pred_fallthru
      _
    %p40 = scmp.eq.s32.totalorder 0, 0
    // Predicated region
    $region18: #{tpu_custom_call.1} parent=1 // pred_check
      %p41 = pneg %p40
    $region19: #{tpu_custom_call.1} parent=1 // pred_check_branch
      %43 = sbr.rel (%p41) target = $region21
    $region20: #{tpu_custom_call.1} parent=1 // pred_region
      %44 = vst [vmem:[#allocation2] sm:$0xff] 0.0
      %45 = vst [vmem:[#allocation2 + $0x8] sm:$0xff] 0.0
    $region21: #{tpu_custom_call.1} parent=1 // pred_fallthru
      _
    %v46 = vld [vmem:[#allocation3] sm:$0xff]
    %v47 = vld [vmem:[#allocation3 + $0x8] sm:$0xff]
    %v48 = vld [vmem:[#allocation6] sm:$0xff]
    %v49 = vld [vmem:[#allocation6 + $0x8] sm:$0xff]
    %v50 = vld [vmem:[#allocation2] sm:$0xff]
    %v51 = vld [vmem:[#allocation2 + $0x8] sm:$0xff]
    %v52 = vsub.f32 %v46, %v48
    %v53 = vsub.f32 %v47, %v49
    %v54 = vand.u32 2147483647, %v52
    %v55 = vand.u32 2147483647, %v53
    %v56 = vrcp.pop %v48
    %v57 = vmul.f32 %v54, %v56
    %v58 = vrcp.pop %v49
    %v59 = vmul.f32 %v55, %v58
    %v60 = vadd.f32 %v50, %v57
    %v61 = vadd.f32 %v51, %v59
    %62 = vst [vmem:[#allocation2] sm:$0xff] %v60
    %63 = vst [vmem:[#allocation2 + $0x8] sm:$0xff] %v61
    // Predicated region
    $region22: #{tpu_custom_call.1} parent=1 // pred_check
      %p64 = pneg %p40
    $region23: #{tpu_custom_call.1} parent=1 // pred_check_branch
      %66 = sbr.rel (%p64) target = $region25
    $region24: #{tpu_custom_call.1} parent=1 // pred_region
      %v67 = vld [vmem:[#allocation2] sm:$0xff]
      %v68 = vld [vmem:[#allocation2 + $0x8] sm:$0xff]
      %v69 = vadd.f32 %v67, %v68
      %70 = vadd.xlane.f32.xlu0 %v69
      %v71 = vpop.xlane.xlu0 %70
      %v72 = vrot.slane %v71, 4
      %v73 = vadd.f32 %v71, %v72
      %v74 = vrot.slane %v73, 2
      %v75 = vadd.f32 %v73, %v74
      %v76 = vrot.slane %v75, 1
      %v77 = vadd.f32 %v75, %v76
      %s78 = vtos %v77
      %s79 = scalar_lea.smem [#allocation8], 0
      %80 = sst [smem:[%s79]] %s78
    $region25: #{tpu_custom_call.1} parent=1 // pred_fallthru
      _
    // Predicated region
    $region26: #{tpu_custom_call.1} parent=1 // pred_check
      _
    $region27: #{tpu_custom_call.1} parent=1 // pred_check_branch
      %82 = sbr.rel (0) target = $region29
    $region28: #{tpu_custom_call.1} parent=1 // pred_region
      %s84 = ssub.s32 16, 16
      %85 = vsyncadd [#allocation5], %s84
      %88 = dma.smem_to_hbm [#allocation8], 16, %s2, [#allocation5]
    $region29: #{tpu_custom_call.1} parent=1 // pred_fallthru
      _
    // Predicated region
    $region30: #{tpu_custom_call.1} parent=1 // pred_check
      _
    $region31: #{tpu_custom_call.1} parent=1 // pred_check_branch
      %90 = sbr.rel (0) target = $region33
    $region32: #{tpu_custom_call.1} parent=1 // pred_region
      %91 = dma.done [#allocation5], 16
    $region33: #{tpu_custom_call.1} parent=1 // pred_fallthru
      _
    %92 = sfence
    %93 = vsyncpa [#allocation4], 1
    %94 = vsyncpa [#allocation7], 1
    %95 = vsyncpa [#allocation5], 1

</llo_original>
